<compile_context>
chip_gen: v5e
topology: v5e:2x2
jax: 0.10.0
libtpu: 0.0.40
codegen_flags: <defaults>
</compile_context>

<pallas_src>
import jax
import jax.numpy as jnp
from jax.experimental import pallas as pl
from jax.experimental.pallas import tpu as pltpu


def _fused_kernel(x58_ref, x51_ref, w_ref, s1_ref, b2_ref, o_ref):
    # BN1 scale (its bias is folded into b2) + residual add          (VPU)
    x = x58_ref[...] * s1_ref[...] + x51_ref[...]
    # 1x1 conv with BN2 scale folded in: (Cout,Cin) @ (Cin,TM)       (MXU)
    y = jnp.dot(w_ref[...], x, preferred_element_type=jnp.float32)
    # folded bias: s2*(w@b1) + (beta2 - mean2*s2)
    o_ref[...] = y + b2_ref[...]


def fused_bn_add_conv_bn(x58, x51, conv_w, bn1, bn2, eps=1e-5):
    """x58, x51: (N, Cin, H, W) f32.  conv_w: (Cout, Cin, 1, 1).
    bn1/bn2: dict with 'gamma','beta','mean','var' (inference / running stats)."""
    N, Cin, H, W = x58.shape
    Cout = conv_w.shape[0]
    M = H * W

    # ---- fold BN parameters (tiny vectors, done once at trace time) ----
    s1 = bn1["gamma"] / jnp.sqrt(bn1["var"] + eps)            # (Cin,)
    b1 = bn1["beta"] - bn1["mean"] * s1                       # (Cin,)
    s2 = bn2["gamma"] / jnp.sqrt(bn2["var"] + eps)            # (Cout,)
    b2 = bn2["beta"] - bn2["mean"] * s2                       # (Cout,)

    w = conv_w.reshape(Cout, Cin)
    w_f = w * s2[:, None]                                     # BN2 scale -> weight
    b2_f = s2 * (w @ b1) + b2                                 # BN1 bias -> output bias

    # ---- native NCHW views (no transposes) ----
    x58_m = x58.reshape(N, Cin, M)
    x51_m = x51.reshape(N, Cin, M)
    s1_m = s1.reshape(Cin, 1)
    b2_m = b2_f.reshape(Cout, 1)

    # lane-dim tiling: one full tile for small spatial sizes, 512 lanes otherwise
    TM = M if M <= 1024 else 512
    n_m = pl.cdiv(M, TM)

    out_m = pl.pallas_call(
        _fused_kernel,
        out_shape=jax.ShapeDtypeStruct((N, Cout, M), jnp.float32),
        grid=(N, n_m),
        in_specs=[
            pl.BlockSpec((None, Cin, TM), lambda b, m: (b, 0, m)),   # x58 tile
            pl.BlockSpec((None, Cin, TM), lambda b, m: (b, 0, m)),   # x51 tile
            pl.BlockSpec((Cout, Cin), lambda b, m: (0, 0)),          # folded weight (resident)
            pl.BlockSpec((Cin, 1), lambda b, m: (0, 0)),             # BN1 scale   (resident)
            pl.BlockSpec((Cout, 1), lambda b, m: (0, 0)),            # folded bias (resident)
        ],
        out_specs=pl.BlockSpec((None, Cout, TM), lambda b, m: (b, 0, m)),
        compiler_params=pltpu.CompilerParams(
            dimension_semantics=("parallel", "parallel"),
        ),
    )(x58_m, x51_m, w_f, s1_m, b2_m)

    # (N, Cout, M) -> (N, Cout, H, W): pure reshape, no transpose
    return out_m.reshape(N, Cout, H, W)


def _reference(x58, x51, conv_w, bn1, bn2, eps=1e-5):
    # Pure-JAX reference with the same inference semantics.
    def bn(x, p):
        s = p["gamma"] / jnp.sqrt(p["var"] + eps)
        b = p["beta"] - p["mean"] * s
        return x * s[None, :, None, None] + b[None, :, None, None]

    y = bn(x58, bn1) + x51
    y = jnp.einsum("nchw,oc->nohw", y, conv_w.reshape(conv_w.shape[0], conv_w.shape[1]))
    return bn(y, bn2)


if __name__ == "__main__":
    key = jax.random.PRNGKey(0)
    k = jax.random.split(key, 12)

    N, Cin, Cout, H, W = 1, 24, 144, 28, 28

    x58 = jax.random.normal(k[0], (N, Cin, H, W), dtype=jnp.float32)
    x51 = jax.random.normal(k[1], (N, Cin, H, W), dtype=jnp.float32)

    # Deterministic synthetic parameters (shapes from the module's __init__).
    conv_w = jax.random.normal(k[2], (Cout, Cin, 1, 1), dtype=jnp.float32) * 0.1
    bn1 = {
        "gamma": 1.0 + 0.1 * jax.random.normal(k[3], (Cin,), dtype=jnp.float32),
        "beta": 0.1 * jax.random.normal(k[4], (Cin,), dtype=jnp.float32),
        "mean": 0.1 * jax.random.normal(k[5], (Cin,), dtype=jnp.float32),
        "var": jnp.abs(1.0 + 0.1 * jax.random.normal(k[6], (Cin,), dtype=jnp.float32)),
    }
    bn2 = {
        "gamma": 1.0 + 0.1 * jax.random.normal(k[7], (Cout,), dtype=jnp.float32),
        "beta": 0.1 * jax.random.normal(k[8], (Cout,), dtype=jnp.float32),
        "mean": 0.1 * jax.random.normal(k[9], (Cout,), dtype=jnp.float32),
        "var": jnp.abs(1.0 + 0.1 * jax.random.normal(k[10], (Cout,), dtype=jnp.float32)),
    }

    out = fused_bn_add_conv_bn(x58, x51, conv_w, bn1, bn2)
    out = jax.block_until_ready(out)

    ref = jax.block_until_ready(_reference(x58, x51, conv_w, bn1, bn2))
    assert out.shape == (N, Cout, H, W), out.shape
    err = float(jnp.max(jnp.abs(out - ref)))
    assert jnp.allclose(out, ref, atol=2e-4, rtol=2e-4), err

    print("KERNEL_OK")
</pallas_src>

<mosaic_0001>
module attributes {stable_mosaic.version = 11 : i64} {
  func.func @_fused_kernel(%arg0: i32, %arg1: i32, %arg2: memref<1x24x784xf32, #tpu.memory_space<vmem>>, %arg3: memref<1x24x784xf32, #tpu.memory_space<vmem>>, %arg4: memref<144x24xf32, #tpu.memory_space<vmem>>, %arg5: memref<24x1xf32, #tpu.memory_space<vmem>>, %arg6: memref<144x1xf32, #tpu.memory_space<vmem>>, %arg7: memref<1x144x784xf32, #tpu.memory_space<vmem>>) attributes {dimension_semantics = [#tpu.dimension_semantics<parallel>, #tpu.dimension_semantics<parallel>], iteration_bounds = array<i64: 1, 1>, scalar_prefetch = 0 : i64, scratch_operands = 0 : i64, tpu.core_type = #tpu.core_type<tc>, window_params = [{transform_indices = @transform_0, window_bounds = array<i64: 1, 24, 784>}, {transform_indices = @transform_1, window_bounds = array<i64: 1, 24, 784>}, {pipeline_mode = #tpu.pipeline_mode<synchronous>, transform_indices = @transform_2, window_bounds = array<i64: 144, 24>}, {pipeline_mode = #tpu.pipeline_mode<synchronous>, transform_indices = @transform_3, window_bounds = array<i64: 24, 1>}, {pipeline_mode = #tpu.pipeline_mode<synchronous>, transform_indices = @transform_4, window_bounds = array<i64: 144, 1>}, {transform_indices = @transform_5, window_bounds = array<i64: 1, 144, 784>}]} {
    %c0 = arith.constant 0 : index
    %c0_0 = arith.constant 0 : index
    %c0_1 = arith.constant 0 : index
    %0 = vector.load %arg2[%c0, %c0_0, %c0_1] : memref<1x24x784xf32, #tpu.memory_space<vmem>>, vector<1x24x784xf32>
    %1 = vector.shape_cast %0 : vector<1x24x784xf32> to vector<24x784xf32>
    %c0_2 = arith.constant 0 : index
    %c0_3 = arith.constant 0 : index
    %2 = vector.load %arg5[%c0_2, %c0_3] : memref<24x1xf32, #tpu.memory_space<vmem>>, vector<24x1xf32>
    %3 = vector.broadcast %2 : vector<24x1xf32> to vector<24x784xf32>
    %4 = arith.mulf %1, %3 : vector<24x784xf32>
    %c0_4 = arith.constant 0 : index
    %c0_5 = arith.constant 0 : index
    %c0_6 = arith.constant 0 : index
    %5 = vector.load %arg3[%c0_4, %c0_5, %c0_6] : memref<1x24x784xf32, #tpu.memory_space<vmem>>, vector<1x24x784xf32>
    %6 = vector.shape_cast %5 : vector<1x24x784xf32> to vector<24x784xf32>
    %7 = arith.addf %4, %6 : vector<24x784xf32>
    %c0_7 = arith.constant 0 : index
    %c0_8 = arith.constant 0 : index
    %8 = vector.load %arg4[%c0_7, %c0_8] : memref<144x24xf32, #tpu.memory_space<vmem>>, vector<144x24xf32>
    %cst = arith.constant dense<0.000000e+00> : vector<144x784xf32>
    %9 = tpu.matmul %8, %7, %cst {dimension_numbers = #tpu.dot_dimension_numbers<[1], [0], [0], [1], [0, 0, 1, 1], [], []>} : vector<144x24xf32>, vector<24x784xf32>, vector<144x784xf32> -> vector<144x784xf32>
    %c0_9 = arith.constant 0 : index
    %c0_10 = arith.constant 0 : index
    %10 = vector.load %arg6[%c0_9, %c0_10] : memref<144x1xf32, #tpu.memory_space<vmem>>, vector<144x1xf32>
    %11 = vector.broadcast %10 : vector<144x1xf32> to vector<144x784xf32>
    %12 = arith.addf %9, %11 : vector<144x784xf32>
    %c0_11 = arith.constant 0 : index
    %c0_12 = arith.constant 0 : index
    %c0_13 = arith.constant 0 : index
    %13 = vector.load %arg7[%c0_11, %c0_12, %c0_13] : memref<1x144x784xf32, #tpu.memory_space<vmem>>, vector<1x144x784xf32>
    %14 = vector.shape_cast %13 : vector<1x144x784xf32> to vector<144x784xf32>
    %15 = vector.shape_cast %12 : vector<144x784xf32> to vector<1x144x784xf32>
    tpu.vector_store %arg7[%c0_11, %c0_12, %c0_13], %15 {strides = array<i32>} : memref<1x144x784xf32, #tpu.memory_space<vmem>>, vector<1x144x784xf32>,
    return
  }
  func.func @transform_0(%arg0: i32, %arg1: i32) -> (i32, i32, i32) {
    %c0_i32 = arith.constant 0 : i32
    %c0_i32_0 = arith.constant 0 : i32
    return %arg0, %c0_i32, %arg1 : i32, i32, i32
  }
  func.func @transform_1(%arg0: i32, %arg1: i32) -> (i32, i32, i32) {
    %c0_i32 = arith.constant 0 : i32
    %c0_i32_0 = arith.constant 0 : i32
    return %arg0, %c0_i32, %arg1 : i32, i32, i32
  }
  func.func @transform_2(%arg0: i32, %arg1: i32) -> (i32, i32) {
    %c0_i32 = arith.constant 0 : i32
    %c0_i32_0 = arith.constant 0 : i32
    %c0_i32_1 = arith.constant 0 : i32
    return %c0_i32, %c0_i32_0 : i32, i32
  }
  func.func @transform_3(%arg0: i32, %arg1: i32) -> (i32, i32) {
    %c0_i32 = arith.constant 0 : i32
    %c0_i32_0 = arith.constant 0 : i32
    %c0_i32_1 = arith.constant 0 : i32
    return %c0_i32, %c0_i32_0 : i32, i32
  }
  func.func @transform_4(%arg0: i32, %arg1: i32) -> (i32, i32) {
    %c0_i32 = arith.constant 0 : i32
    %c0_i32_0 = arith.constant 0 : i32
    %c0_i32_1 = arith.constant 0 : i32
    return %c0_i32, %c0_i32_0 : i32, i32
  }
  func.func @transform_5(%arg0: i32, %arg1: i32) -> (i32, i32, i32) {
    %c0_i32 = arith.constant 0 : i32
    %c0_i32_0 = arith.constant 0 : i32
    return %arg0, %c0_i32, %arg1 : i32, i32, i32
  }
}

</mosaic_0001>

<llo_original>
// kernel: tpu_custom_call.1
$region0: #{tpu_custom_call.1}
  #allocation0 [shape = 'u32[]', space=smem, size = 0x4, offset = 0x4, fixed_abs, tag = 'smem constant byte address 0x4 - core index']
  #allocation1 [shape = 'u32[72,128]{1,0:T(1,128)}', space=vmem, size = 0x9000, scoped, tag = 'internal scratch']
  %s0 = inlined_call_operand.vmem [shape: f32[1,24,784], index: 0, kind: input, shape index: {}]
  %s1 = inlined_call_operand.vmem [shape: f32[1,24,784], index: 1, kind: input, shape index: {}]
  %s2 = inlined_call_operand.vmem [shape: f32[144,24], index: 2, kind: input, shape index: {}]
  %s3 = inlined_call_operand.vmem [shape: f32[24,1], index: 3, kind: input, shape index: {}]
  %s4 = inlined_call_operand.vmem [shape: f32[144,1], index: 4, kind: input, shape index: {}]
  %s5 = inlined_call_operand.hbm [shape: f32[1,144,784], index: 5, kind: output, shape index: {}]
  %s6 = sld [smem:[#allocation0]]
  $region30: #{tpu_custom_call.1} parent=0
    _
  %s8 = ssub.s32 1, %s6
  %s9 = scalar_select 0, %s8, %s6
  $region1: #{tpu_custom_call.1} parent=0
    #allocation2 [shape = 'u8[516096]{0}', space=vmem, size = 0x7e000, scoped, tag = 'output window, operand 0, single buffered']
    #allocation3 [shape = 's32[1]{0}', space=sflag, size = 0x4, scoped, tag = 'scoped memory for tpu_custom_call.1']
    %10 = vsyncpa [#allocation3], 0
    // Predicated region
    $region2: #{tpu_custom_call.1} parent=1 // pred_check
      _
    $region3: #{tpu_custom_call.1} parent=1 // pred_check_branch
      %12 = sbr.rel (0) target = $region5
    $region4: #{tpu_custom_call.1} parent=1 // pred_region
      _
    $region5: #{tpu_custom_call.1} parent=1 // pred_fallthru
      _
    // Predicated region
    $region6: #{tpu_custom_call.1} parent=1 // pred_check
      _
    $region7: #{tpu_custom_call.1} parent=1 // pred_check_branch
      %14 = sbr.rel (0) target = $region9
    $region8: #{tpu_custom_call.1} parent=1 // pred_region
      _
    $region9: #{tpu_custom_call.1} parent=1 // pred_fallthru
      _
    // Predicated region
    $region10: #{tpu_custom_call.1} parent=1 // pred_check
      _
    $region11: #{tpu_custom_call.1} parent=1 // pred_check_branch
      %16 = sbr.rel (0) target = $region13
    $region12: #{tpu_custom_call.1} parent=1 // pred_region
      _
    $region13: #{tpu_custom_call.1} parent=1 // pred_fallthru
      _
    // Predicated region
    $region14: #{tpu_custom_call.1} parent=1 // pred_check
      _
    $region15: #{tpu_custom_call.1} parent=1 // pred_check_branch
      %18 = sbr.rel (0) target = $region17
    $region16: #{tpu_custom_call.1} parent=1 // pred_region
      _
    $region17: #{tpu_custom_call.1} parent=1 // pred_fallthru
      _
    // Predicated region
    $region18: #{tpu_custom_call.1} parent=1 // pred_check
      _
    $region19: #{tpu_custom_call.1} parent=1 // pred_check_branch
      %20 = sbr.rel (0) target = $region21
    $region20: #{tpu_custom_call.1} parent=1 // pred_region
      _
    $region21: #{tpu_custom_call.1} parent=1 // pred_fallthru
      _
    %v21 = vld [vmem:[%s0] sm:$0xff]
    %v22 = vld [vmem:[%s0 + $0x8] sm:$0xff]
    %v23 = vld [vmem:[%s0 + $0x10] sm:$0xff]
    %v24 = vld [vmem:[%s0 + $0x18] sm:$0xff]
    %v25 = vld [vmem:[%s0 + $0x20] sm:$0xff]
    %v26 = vld [vmem:[%s0 + $0x28] sm:$0xff]
    %v27 = vld [vmem:[%s0 + $0x30] sm:$0xff]
    %v28 = vld [vmem:[%s0 + $0x38] sm:$0xff]
    %v29 = vld [vmem:[%s0 + $0x40] sm:$0xff]
    %v30 = vld [vmem:[%s0 + $0x48] sm:$0xff]
    %v31 = vld [vmem:[%s0 + $0x50] sm:$0xff]
    %v32 = vld [vmem:[%s0 + $0x58] sm:$0xff]
    %v33 = vld [vmem:[%s0 + $0x60] sm:$0xff]
    %v34 = vld [vmem:[%s0 + $0x68] sm:$0xff]
    %v35 = vld [vmem:[%s0 + $0x70] sm:$0xff]
    %v36 = vld [vmem:[%s0 + $0x78] sm:$0xff]
    %v37 = vld [vmem:[%s0 + $0x80] sm:$0xff]
    %v38 = vld [vmem:[%s0 + $0x88] sm:$0xff]
    %v39 = vld [vmem:[%s0 + $0x90] sm:$0xff]
    %v40 = vld [vmem:[%s0 + $0x98] sm:$0xff]
    %v41 = vld [vmem:[%s0 + $0xa0] sm:$0xff]
    %v42 = vld [vmem:[%s3] sm:$0xff]
    %v43 = vld [vmem:[%s3 + $0x8] sm:$0xff]
    %v44 = vld [vmem:[%s3 + $0x10] sm:$0xff]
    %46 = vset.pattern.permute.xlu0 0
    %47 = vperm.xlu0 %46, %v42
    %v48 = vpop.permute.xlu0 %47
    %51 = vset.pattern.permute.xlu0 0
    %52 = vperm.xlu0 %51, %v43
    %v53 = vpop.permute.xlu0 %52
    %56 = vset.pattern.permute.xlu0 0
    %57 = vperm.xlu0 %56, %v44
    %v58 = vpop.permute.xlu0 %57
    %v60 = vmul.f32 %v21, %v48
    %v61 = vmul.f32 %v22, %v48
    %v62 = vmul.f32 %v23, %v48
    %v63 = vmul.f32 %v24, %v48
    %v64 = vmul.f32 %v25, %v48
    %v65 = vmul.f32 %v26, %v48
    %v66 = vmul.f32 %v27, %v48
    %v67 = vmul.f32 %v28, %v53
    %v68 = vmul.f32 %v29, %v53
    %v69 = vmul.f32 %v30, %v53
    %v70 = vmul.f32 %v31, %v53
    %v71 = vmul.f32 %v32, %v53
    %v72 = vmul.f32 %v33, %v53
    %v73 = vmul.f32 %v34, %v53
    %v74 = vmul.f32 %v35, %v58
    %v75 = vmul.f32 %v36, %v58
    %v76 = vmul.f32 %v37, %v58
    %v77 = vmul.f32 %v38, %v58
    %v78 = vmul.f32 %v39, %v58
    %v79 = vmul.f32 %v40, %v58
    %v80 = vmul.f32 %v41, %v58
    %v81 = vld [vmem:[%s1] sm:$0xff]
    %v82 = vld [vmem:[%s1 + $0x8] sm:$0xff]
    %v83 = vld [vmem:[%s1 + $0x10] sm:$0xff]
    %v84 = vld [vmem:[%s1 + $0x18] sm:$0xff]
    %v85 = vld [vmem:[%s1 + $0x20] sm:$0xff]
    %v86 = vld [vmem:[%s1 + $0x28] sm:$0xff]
    %v87 = vld [vmem:[%s1 + $0x30] sm:$0xff]
    %v88 = vld [vmem:[%s1 + $0x38] sm:$0xff]
    %v89 = vld [vmem:[%s1 + $0x40] sm:$0xff]
    %v90 = vld [vmem:[%s1 + $0x48] sm:$0xff]
    %v91 = vld [vmem:[%s1 + $0x50] sm:$0xff]
    %v92 = vld [vmem:[%s1 + $0x58] sm:$0xff]
    %v93 = vld [vmem:[%s1 + $0x60] sm:$0xff]
    %v94 = vld [vmem:[%s1 + $0x68] sm:$0xff]
    %v95 = vld [vmem:[%s1 + $0x70] sm:$0xff]
    %v96 = vld [vmem:[%s1 + $0x78] sm:$0xff]
    %v97 = vld [vmem:[%s1 + $0x80] sm:$0xff]
    %v98 = vld [vmem:[%s1 + $0x88] sm:$0xff]
    %v99 = vld [vmem:[%s1 + $0x90] sm:$0xff]
    %v100 = vld [vmem:[%s1 + $0x98] sm:$0xff]
    %v101 = vld [vmem:[%s1 + $0xa0] sm:$0xff]
    %v102 = vadd.f32 %v60, %v81
    %v103 = vadd.f32 %v61, %v82
    %v104 = vadd.f32 %v62, %v83
    %v105 = vadd.f32 %v63, %v84
    %v106 = vadd.f32 %v64, %v85
    %v107 = vadd.f32 %v65, %v86
    %v108 = vadd.f32 %v66, %v87
    %v109 = vadd.f32 %v67, %v88
    %v110 = vadd.f32 %v68, %v89
    %v111 = vadd.f32 %v69, %v90
    %v112 = vadd.f32 %v70, %v91
    %v113 = vadd.f32 %v71, %v92
    %v114 = vadd.f32 %v72, %v93
    %v115 = vadd.f32 %v73, %v94
    %v116 = vadd.f32 %v74, %v95
    %v117 = vadd.f32 %v75, %v96
    %v118 = vadd.f32 %v76, %v97
    %v119 = vadd.f32 %v77, %v98
    %v120 = vadd.f32 %v78, %v99
    %v121 = vadd.f32 %v79, %v100
    %v122 = vadd.f32 %v80, %v101
    %v123 = vld [vmem:[%s2] sm:$0xff]
    %v124 = vld [vmem:[%s2 + $0x8] sm:$0xff]
    %v125 = vld [vmem:[%s2 + $0x10] sm:$0xff]
    %v126 = vld [vmem:[%s2 + $0x18] sm:$0xff]
    %v127 = vld [vmem:[%s2 + $0x20] sm:$0xff]
    %v128 = vld [vmem:[%s2 + $0x28] sm:$0xff]
    %v129 = vld [vmem:[%s2 + $0x30] sm:$0xff]
    %v130 = vld [vmem:[%s2 + $0x38] sm:$0xff]
    %v131 = vld [vmem:[%s2 + $0x40] sm:$0xff]
    %v132 = vld [vmem:[%s2 + $0x48] sm:$0xff]
    %v133 = vld [vmem:[%s2 + $0x50] sm:$0xff]
    %v134 = vld [vmem:[%s2 + $0x58] sm:$0xff]
    %v135 = vld [vmem:[%s2 + $0x60] sm:$0xff]
    %v136 = vld [vmem:[%s2 + $0x68] sm:$0xff]
    %v137 = vld [vmem:[%s2 + $0x70] sm:$0xff]
    %v138 = vld [vmem:[%s2 + $0x78] sm:$0xff]
    %v139 = vld [vmem:[%s2 + $0x80] sm:$0xff]
    %v140 = vld [vmem:[%s2 + $0x88] sm:$0xff]
    %v141 = vld [vmem:[%s4] sm:$0xff]
    %v142 = vld [vmem:[%s4 + $0x8] sm:$0xff]
    %v143 = vld [vmem:[%s4 + $0x10] sm:$0xff]
    %v144 = vld [vmem:[%s4 + $0x18] sm:$0xff]
    %v145 = vld [vmem:[%s4 + $0x20] sm:$0xff]
    %v146 = vld [vmem:[%s4 + $0x28] sm:$0xff]
    %v147 = vld [vmem:[%s4 + $0x30] sm:$0xff]
    %v148 = vld [vmem:[%s4 + $0x38] sm:$0xff]
    %v149 = vld [vmem:[%s4 + $0x40] sm:$0xff]
    %v150 = vld [vmem:[%s4 + $0x48] sm:$0xff]
    %v151 = vld [vmem:[%s4 + $0x50] sm:$0xff]
    %v152 = vld [vmem:[%s4 + $0x58] sm:$0xff]
    %v153 = vld [vmem:[%s4 + $0x60] sm:$0xff]
    %v154 = vld [vmem:[%s4 + $0x68] sm:$0xff]
    %v155 = vld [vmem:[%s4 + $0x70] sm:$0xff]
    %v156 = vld [vmem:[%s4 + $0x78] sm:$0xff]
    %v157 = vld [vmem:[%s4 + $0x80] sm:$0xff]
    %v158 = vld [vmem:[%s4 + $0x88] sm:$0xff]
    %160 = vset.pattern.permute.xlu0 0
    %161 = vperm.xlu0 %160, %v141
    %v162 = vpop.permute.xlu0 %161
    %165 = vset.pattern.permute.xlu0 0
    %166 = vperm.xlu0 %165, %v142
    %v167 = vpop.permute.xlu0 %166
    %170 = vset.pattern.permute.xlu0 0
    %171 = vperm.xlu0 %170, %v143
    %v172 = vpop.permute.xlu0 %171
    %175 = vset.pattern.permute.xlu0 0
    %176 = vperm.xlu0 %175, %v144
    %v177 = vpop.permute.xlu0 %176
    %180 = vset.pattern.permute.xlu0 0
    %181 = vperm.xlu0 %180, %v145
    %v182 = vpop.permute.xlu0 %181
    %185 = vset.pattern.permute.xlu0 0
    %186 = vperm.xlu0 %185, %v146
    %v187 = vpop.permute.xlu0 %186
    %190 = vset.pattern.permute.xlu0 0
    %191 = vperm.xlu0 %190, %v147
    %v192 = vpop.permute.xlu0 %191
    %195 = vset.pattern.permute.xlu0 0
    %196 = vperm.xlu0 %195, %v148
    %v197 = vpop.permute.xlu0 %196
    %200 = vset.pattern.permute.xlu0 0
    %201 = vperm.xlu0 %200, %v149
    %v202 = vpop.permute.xlu0 %201
    %205 = vset.pattern.permute.xlu0 0
    %206 = vperm.xlu0 %205, %v150
    %v207 = vpop.permute.xlu0 %206
    %210 = vset.pattern.permute.xlu0 0
    %211 = vperm.xlu0 %210, %v151
    %v212 = vpop.permute.xlu0 %211
    %215 = vset.pattern.permute.xlu0 0
    %216 = vperm.xlu0 %215, %v152
    %v217 = vpop.permute.xlu0 %216
    %220 = vset.pattern.permute.xlu0 0
    %221 = vperm.xlu0 %220, %v153
    %v222 = vpop.permute.xlu0 %221
    %225 = vset.pattern.permute.xlu0 0
    %226 = vperm.xlu0 %225, %v154
    %v227 = vpop.permute.xlu0 %226
    %230 = vset.pattern.permute.xlu0 0
    %231 = vperm.xlu0 %230, %v155
    %v232 = vpop.permute.xlu0 %231
    %235 = vset.pattern.permute.xlu0 0
    %236 = vperm.xlu0 %235, %v156
    %v237 = vpop.permute.xlu0 %236
    %240 = vset.pattern.permute.xlu0 0
    %241 = vperm.xlu0 %240, %v157
    %v242 = vpop.permute.xlu0 %241
    %245 = vset.pattern.permute.xlu0 0
    %246 = vperm.xlu0 %245, %v158
    %v247 = vpop.permute.xlu0 %246
    %vm249 = vcmask 195584
    %v251 = vsel %vm249, %v123, 0
    %v254 = vsel %vm249, %v124, 0
    %v257 = vsel %vm249, %v125, 0
    %v260 = vsel %vm249, %v126, 0
    %v263 = vsel %vm249, %v127, 0
    %v266 = vsel %vm249, %v128, 0
    %v269 = vsel %vm249, %v129, 0
    %v272 = vsel %vm249, %v130, 0
    %v275 = vsel %vm249, %v131, 0
    %v278 = vsel %vm249, %v132, 0
    %v281 = vsel %vm249, %v133, 0
    %v284 = vsel %vm249, %v134, 0
    %v287 = vsel %vm249, %v135, 0
    %v290 = vsel %vm249, %v136, 0
    %v293 = vsel %vm249, %v137, 0
    %v296 = vsel %vm249, %v138, 0
    %v299 = vsel %vm249, %v139, 0
    %v302 = vsel %vm249, %v140, 0
    %304 = vmatpush.msra.mxu0 0.0
    %305 = vmatpush.msra.mxu0 0.0
    %306 = vmatpush.msra.mxu0 0.0
    %307 = vmatpush.msra.mxu0 0.0
    %308 = vmatpush.msra.mxu0 0.0
    %309 = vmatpush.msra.mxu0 0.0
    %310 = vmatpush.msra.mxu0 0.0
    %311 = vmatpush.msra.mxu0 0.0
    %312 = vmatpush.msra.mxu0 0.0
    %313 = vmatpush.msra.mxu0 0.0
    %314 = vmatpush.msra.mxu0 0.0
    %315 = vmatpush.msra.mxu0 0.0
    %316 = vmatpush.msra.mxu0 0.0
    %317 = vmatpush.msra.mxu0 %v116
    %318 = vmatpush.msra.mxu0 %v109
    %319 = vmatpush.msra.mxu0 %v102
    %320 = vmatmul.f32.gmra.mxu0 %v251
    %v321 = vpop.f32.mrf.mxu0
    %v322 = vadd.f32 %v162, %v321
    %323 = vmatmul.f32.gmra.mxu0 %v254
    %v324 = vpop.f32.mrf.mxu0
    %v325 = vadd.f32 %v167, %v324
    %326 = vmatmul.f32.gmra.mxu0 %v257
    %v327 = vpop.f32.mrf.mxu0
    %v328 = vadd.f32 %v172, %v327
    %329 = vmatmul.f32.gmra.mxu0 %v260
    %v330 = vpop.f32.mrf.mxu0
    %v331 = vadd.f32 %v177, %v330
    %332 = vmatmul.f32.gmra.mxu0 %v263
    %v333 = vpop.f32.mrf.mxu0
    %v334 = vadd.f32 %v182, %v333
    %335 = vmatmul.f32.gmra.mxu0 %v266
    %v336 = vpop.f32.mrf.mxu0
    %v337 = vadd.f32 %v187, %v336
    %338 = vmatmul.f32.gmra.mxu0 %v269
    %v339 = vpop.f32.mrf.mxu0
    %v340 = vadd.f32 %v192, %v339
    %341 = vmatmul.f32.gmra.mxu0 %v272
    %v342 = vpop.f32.mrf.mxu0
    %v343 = vadd.f32 %v197, %v342
    %344 = vmatmul.f32.gmra.mxu0 %v275
    %v345 = vpop.f32.mrf.mxu0
    %v346 = vadd.f32 %v202, %v345
    %347 = vmatmul.f32.gmra.mxu0 %v278
    %v348 = vpop.f32.mrf.mxu0
    %v349 = vadd.f32 %v207, %v348
    %350 = vmatmul.f32.gmra.mxu0 %v281
    %v351 = vpop.f32.mrf.mxu0
    %v352 = vadd.f32 %v212, %v351
    %353 = vmatmul.f32.gmra.mxu0 %v284
    %v354 = vpop.f32.mrf.mxu0
    %v355 = vadd.f32 %v217, %v354
    %356 = vmatmul.f32.gmra.mxu0 %v287
    %v357 = vpop.f32.mrf.mxu0
    %v358 = vadd.f32 %v222, %v357
    %359 = vmatmul.f32.gmra.mxu0 %v290
    %v360 = vpop.f32.mrf.mxu0
    %v361 = vadd.f32 %v227, %v360
    %362 = vmatmul.f32.gmra.mxu0 %v293
    %v363 = vpop.f32.mrf.mxu0
    %v364 = vadd.f32 %v232, %v363
    %365 = vmatmul.f32.gmra.mxu0 %v296
    %v366 = vpop.f32.mrf.mxu0
    %v367 = vadd.f32 %v237, %v366
    %368 = vmatmul.f32.gmra.mxu0 %v299
    %v369 = vpop.f32.mrf.mxu0
    %v370 = vadd.f32 %v242, %v369
    %371 = vmatmul.f32.gmra.mxu0 %v302
    %v372 = vpop.f32.mrf.mxu0
    %v373 = vadd.f32 %v247, %v372
    %374 = vdwg.mxu0
    %375 = vmatpush.msra.mxu0 0.0
    %376 = vmatpush.msra.mxu0 0.0
    %377 = vmatpush.msra.mxu0 0.0
    %378 = vmatpush.msra.mxu0 0.0
    %379 = vmatpush.msra.mxu0 0.0
    %380 = vmatpush.msra.mxu0 0.0
    %381 = vmatpush.msra.mxu0 0.0
    %382 = vmatpush.msra.mxu0 0.0
    %383 = vmatpush.msra.mxu0 0.0
    %384 = vmatpush.msra.mxu0 0.0
    %385 = vmatpush.msra.mxu0 0.0
    %386 = vmatpush.msra.mxu0 0.0
    %387 = vmatpush.msra.mxu0 0.0
    %388 = vmatpush.msra.mxu0 %v117
    %389 = vmatpush.msra.mxu0 %v110
    %390 = vmatpush.msra.mxu0 %v103
    %391 = vmatmul.f32.gmra.mxu0 %v251
    %v392 = vpop.f32.mrf.mxu0
    %v393 = vadd.f32 %v162, %v392
    %394 = vmatmul.f32.gmra.mxu0 %v254
    %v395 = vpop.f32.mrf.mxu0
    %v396 = vadd.f32 %v167, %v395
    %397 = vmatmul.f32.gmra.mxu0 %v257
    %v398 = vpop.f32.mrf.mxu0
    %v399 = vadd.f32 %v172, %v398
    %400 = vmatmul.f32.gmra.mxu0 %v260
    %v401 = vpop.f32.mrf.mxu0
    %v402 = vadd.f32 %v177, %v401
    %403 = vmatmul.f32.gmra.mxu0 %v263
    %v404 = vpop.f32.mrf.mxu0
    %v405 = vadd.f32 %v182, %v404
    %406 = vmatmul.f32.gmra.mxu0 %v266
    %v407 = vpop.f32.mrf.mxu0
    %v408 = vadd.f32 %v187, %v407
    %409 = vmatmul.f32.gmra.mxu0 %v269
    %v410 = vpop.f32.mrf.mxu0
    %v411 = vadd.f32 %v192, %v410
    %412 = vmatmul.f32.gmra.mxu0 %v272
    %v413 = vpop.f32.mrf.mxu0
    %v414 = vadd.f32 %v197, %v413
    %415 = vmatmul.f32.gmra.mxu0 %v275
    %v416 = vpop.f32.mrf.mxu0
    %v417 = vadd.f32 %v202, %v416
    %418 = vmatmul.f32.gmra.mxu0 %v278
    %v419 = vpop.f32.mrf.mxu0
    %v420 = vadd.f32 %v207, %v419
    %421 = vmatmul.f32.gmra.mxu0 %v281
    %v422 = vpop.f32.mrf.mxu0
    %v423 = vadd.f32 %v212, %v422
    %424 = vmatmul.f32.gmra.mxu0 %v284
    %v425 = vpop.f32.mrf.mxu0
    %v426 = vadd.f32 %v217, %v425
    %427 = vmatmul.f32.gmra.mxu0 %v287
    %v428 = vpop.f32.mrf.mxu0
    %v429 = vadd.f32 %v222, %v428
    %430 = vmatmul.f32.gmra.mxu0 %v290
    %v431 = vpop.f32.mrf.mxu0
    %v432 = vadd.f32 %v227, %v431
    %433 = vmatmul.f32.gmra.mxu0 %v293
    %v434 = vpop.f32.mrf.mxu0
    %v435 = vadd.f32 %v232, %v434
    %436 = vmatmul.f32.gmra.mxu0 %v296
    %v437 = vpop.f32.mrf.mxu0
    %v438 = vadd.f32 %v237, %v437
    %439 = vmatmul.f32.gmra.mxu0 %v299
    %v440 = vpop.f32.mrf.mxu0
    %v441 = vadd.f32 %v242, %v440
    %442 = vmatmul.f32.gmra.mxu0 %v302
    %v443 = vpop.f32.mrf.mxu0
    %v444 = vadd.f32 %v247, %v443
    %445 = vdwg.mxu0
    %446 = vmatpush.msra.mxu0 0.0
    %447 = vmatpush.msra.mxu0 0.0
    %448 = vmatpush.msra.mxu0 0.0
    %449 = vmatpush.msra.mxu0 0.0
    %450 = vmatpush.msra.mxu0 0.0
    %451 = vmatpush.msra.mxu0 0.0
    %452 = vmatpush.msra.mxu0 0.0
    %453 = vmatpush.msra.mxu0 0.0
    %454 = vmatpush.msra.mxu0 0.0
    %455 = vmatpush.msra.mxu0 0.0
    %456 = vmatpush.msra.mxu0 0.0
    %457 = vmatpush.msra.mxu0 0.0
    %458 = vmatpush.msra.mxu0 0.0
    %459 = vmatpush.msra.mxu0 %v118
    %460 = vmatpush.msra.mxu0 %v111
    %461 = vmatpush.msra.mxu0 %v104
    %462 = vmatmul.f32.gmra.mxu0 %v251
    %v463 = vpop.f32.mrf.mxu0
    %v464 = vadd.f32 %v162, %v463
    %465 = vmatmul.f32.gmra.mxu0 %v254
    %v466 = vpop.f32.mrf.mxu0
    %v467 = vadd.f32 %v167, %v466
    %468 = vmatmul.f32.gmra.mxu0 %v257
    %v469 = vpop.f32.mrf.mxu0
    %v470 = vadd.f32 %v172, %v469
    %471 = vmatmul.f32.gmra.mxu0 %v260
    %v472 = vpop.f32.mrf.mxu0
    %v473 = vadd.f32 %v177, %v472
    %474 = vmatmul.f32.gmra.mxu0 %v263
    %v475 = vpop.f32.mrf.mxu0
    %v476 = vadd.f32 %v182, %v475
    %477 = vmatmul.f32.gmra.mxu0 %v266
    %v478 = vpop.f32.mrf.mxu0
    %v479 = vadd.f32 %v187, %v478
    %480 = vmatmul.f32.gmra.mxu0 %v269
    %v481 = vpop.f32.mrf.mxu0
    %v482 = vadd.f32 %v192, %v481
    %483 = vmatmul.f32.gmra.mxu0 %v272
    %v484 = vpop.f32.mrf.mxu0
    %v485 = vadd.f32 %v197, %v484
    %486 = vmatmul.f32.gmra.mxu0 %v275
    %v487 = vpop.f32.mrf.mxu0
    %v488 = vadd.f32 %v202, %v487
    %489 = vmatmul.f32.gmra.mxu0 %v278
    %v490 = vpop.f32.mrf.mxu0
    %v491 = vadd.f32 %v207, %v490
    %492 = vmatmul.f32.gmra.mxu0 %v281
    %v493 = vpop.f32.mrf.mxu0
    %v494 = vadd.f32 %v212, %v493
    %495 = vmatmul.f32.gmra.mxu0 %v284
    %v496 = vpop.f32.mrf.mxu0
    %v497 = vadd.f32 %v217, %v496
    %498 = vmatmul.f32.gmra.mxu0 %v287
    %v499 = vpop.f32.mrf.mxu0
    %v500 = vadd.f32 %v222, %v499
    %501 = vmatmul.f32.gmra.mxu0 %v290
    %v502 = vpop.f32.mrf.mxu0
    %v503 = vadd.f32 %v227, %v502
    %504 = vmatmul.f32.gmra.mxu0 %v293
    %v505 = vpop.f32.mrf.mxu0
    %v506 = vadd.f32 %v232, %v505
    %507 = vmatmul.f32.gmra.mxu0 %v296
    %v508 = vpop.f32.mrf.mxu0
    %v509 = vadd.f32 %v237, %v508
    %510 = vmatmul.f32.gmra.mxu0 %v299
    %v511 = vpop.f32.mrf.mxu0
    %v512 = vadd.f32 %v242, %v511
    %513 = vmatmul.f32.gmra.mxu0 %v302
    %v514 = vpop.f32.mrf.mxu0
    %v515 = vadd.f32 %v247, %v514
    %516 = vdwg.mxu0
    %517 = vmatpush.msra.mxu0 0.0
    %518 = vmatpush.msra.mxu0 0.0
    %519 = vmatpush.msra.mxu0 0.0
    %520 = vmatpush.msra.mxu0 0.0
    %521 = vmatpush.msra.mxu0 0.0
    %522 = vmatpush.msra.mxu0 0.0
    %523 = vmatpush.msra.mxu0 0.0
    %524 = vmatpush.msra.mxu0 0.0
    %525 = vmatpush.msra.mxu0 0.0
    %526 = vmatpush.msra.mxu0 0.0
    %527 = vmatpush.msra.mxu0 0.0
    %528 = vmatpush.msra.mxu0 0.0
    %529 = vmatpush.msra.mxu0 0.0
    %530 = vmatpush.msra.mxu0 %v119
    %531 = vmatpush.msra.mxu0 %v112
    %532 = vmatpush.msra.mxu0 %v105
    %533 = vmatmul.f32.gmra.mxu0 %v251
    %v534 = vpop.f32.mrf.mxu0
    %v535 = vadd.f32 %v162, %v534
    %536 = vmatmul.f32.gmra.mxu0 %v254
    %v537 = vpop.f32.mrf.mxu0
    %v538 = vadd.f32 %v167, %v537
    %539 = vmatmul.f32.gmra.mxu0 %v257
    %v540 = vpop.f32.mrf.mxu0
    %v541 = vadd.f32 %v172, %v540
    %542 = vmatmul.f32.gmra.mxu0 %v260
    %v543 = vpop.f32.mrf.mxu0
    %v544 = vadd.f32 %v177, %v543
    %545 = vmatmul.f32.gmra.mxu0 %v263
    %v546 = vpop.f32.mrf.mxu0
    %v547 = vadd.f32 %v182, %v546
    %548 = vmatmul.f32.gmra.mxu0 %v266
    %v549 = vpop.f32.mrf.mxu0
    %v550 = vadd.f32 %v187, %v549
    %551 = vmatmul.f32.gmra.mxu0 %v269
    %v552 = vpop.f32.mrf.mxu0
    %v553 = vadd.f32 %v192, %v552
    %554 = vmatmul.f32.gmra.mxu0 %v272
    %v555 = vpop.f32.mrf.mxu0
    %v556 = vadd.f32 %v197, %v555
    %557 = vmatmul.f32.gmra.mxu0 %v275
    %v558 = vpop.f32.mrf.mxu0
    %v559 = vadd.f32 %v202, %v558
    %560 = vmatmul.f32.gmra.mxu0 %v278
    %v561 = vpop.f32.mrf.mxu0
    %v562 = vadd.f32 %v207, %v561
    %563 = vmatmul.f32.gmra.mxu0 %v281
    %v564 = vpop.f32.mrf.mxu0
    %v565 = vadd.f32 %v212, %v564
    %566 = vmatmul.f32.gmra.mxu0 %v284
    %v567 = vpop.f32.mrf.mxu0
    %v568 = vadd.f32 %v217, %v567
    %569 = vmatmul.f32.gmra.mxu0 %v287
    %v570 = vpop.f32.mrf.mxu0
    %v571 = vadd.f32 %v222, %v570
    %572 = vmatmul.f32.gmra.mxu0 %v290
    %v573 = vpop.f32.mrf.mxu0
    %v574 = vadd.f32 %v227, %v573
    %575 = vmatmul.f32.gmra.mxu0 %v293
    %v576 = vpop.f32.mrf.mxu0
    %v577 = vadd.f32 %v232, %v576
    %578 = vmatmul.f32.gmra.mxu0 %v296
    %v579 = vpop.f32.mrf.mxu0
    %v580 = vadd.f32 %v237, %v579
    %581 = vmatmul.f32.gmra.mxu0 %v299
    %v582 = vpop.f32.mrf.mxu0
    %v583 = vadd.f32 %v242, %v582
    %584 = vmatmul.f32.gmra.mxu0 %v302
    %v585 = vpop.f32.mrf.mxu0
    %v586 = vadd.f32 %v247, %v585
    %587 = vdwg.mxu0
    %588 = vmatpush.msra.mxu0 0.0
    %589 = vmatpush.msra.mxu0 0.0
    %590 = vmatpush.msra.mxu0 0.0
    %591 = vmatpush.msra.mxu0 0.0
    %592 = vmatpush.msra.mxu0 0.0
    %593 = vmatpush.msra.mxu0 0.0
    %594 = vmatpush.msra.mxu0 0.0
    %595 = vmatpush.msra.mxu0 0.0
    %596 = vmatpush.msra.mxu0 0.0
    %597 = vmatpush.msra.mxu0 0.0
    %598 = vmatpush.msra.mxu0 0.0
    %599 = vmatpush.msra.mxu0 0.0
    %600 = vmatpush.msra.mxu0 0.0
    %601 = vmatpush.msra.mxu0 %v120
    %602 = vmatpush.msra.mxu0 %v113
    %603 = vmatpush.msra.mxu0 %v106
    %604 = vmatmul.f32.gmra.mxu0 %v251
    %v605 = vpop.f32.mrf.mxu0
    %v606 = vadd.f32 %v162, %v605
    %607 = vmatmul.f32.gmra.mxu0 %v254
    %v608 = vpop.f32.mrf.mxu0
    %v609 = vadd.f32 %v167, %v608
    %610 = vmatmul.f32.gmra.mxu0 %v257
    %v611 = vpop.f32.mrf.mxu0
    %v612 = vadd.f32 %v172, %v611
    %613 = vmatmul.f32.gmra.mxu0 %v260
    %v614 = vpop.f32.mrf.mxu0
    %v615 = vadd.f32 %v177, %v614
    %616 = vmatmul.f32.gmra.mxu0 %v263
    %v617 = vpop.f32.mrf.mxu0
    %v618 = vadd.f32 %v182, %v617
    %619 = vmatmul.f32.gmra.mxu0 %v266
    %v620 = vpop.f32.mrf.mxu0
    %v621 = vadd.f32 %v187, %v620
    %622 = vmatmul.f32.gmra.mxu0 %v269
    %v623 = vpop.f32.mrf.mxu0
    %v624 = vadd.f32 %v192, %v623
    %625 = vmatmul.f32.gmra.mxu0 %v272
    %v626 = vpop.f32.mrf.mxu0
    %v627 = vadd.f32 %v197, %v626
    %628 = vmatmul.f32.gmra.mxu0 %v275
    %v629 = vpop.f32.mrf.mxu0
    %v630 = vadd.f32 %v202, %v629
    %631 = vmatmul.f32.gmra.mxu0 %v278
    %v632 = vpop.f32.mrf.mxu0
    %v633 = vadd.f32 %v207, %v632
    %634 = vmatmul.f32.gmra.mxu0 %v281
    %v635 = vpop.f32.mrf.mxu0
    %v636 = vadd.f32 %v212, %v635
    %637 = vmatmul.f32.gmra.mxu0 %v284
    %v638 = vpop.f32.mrf.mxu0
    %v639 = vadd.f32 %v217, %v638
    %640 = vmatmul.f32.gmra.mxu0 %v287
    %v641 = vpop.f32.mrf.mxu0
    %v642 = vadd.f32 %v222, %v641
    %643 = vmatmul.f32.gmra.mxu0 %v290
    %v644 = vpop.f32.mrf.mxu0
    %v645 = vadd.f32 %v227, %v644
    %646 = vmatmul.f32.gmra.mxu0 %v293
    %v647 = vpop.f32.mrf.mxu0
    %v648 = vadd.f32 %v232, %v647
    %649 = vmatmul.f32.gmra.mxu0 %v296
    %v650 = vpop.f32.mrf.mxu0
    %v651 = vadd.f32 %v237, %v650
    %652 = vmatmul.f32.gmra.mxu0 %v299
    %v653 = vpop.f32.mrf.mxu0
    %v654 = vadd.f32 %v242, %v653
    %655 = vmatmul.f32.gmra.mxu0 %v302
    %v656 = vpop.f32.mrf.mxu0
    %v657 = vadd.f32 %v247, %v656
    %658 = vdwg.mxu0
    %659 = vmatpush.msra.mxu0 0.0
    %660 = vmatpush.msra.mxu0 0.0
    %661 = vmatpush.msra.mxu0 0.0
    %662 = vmatpush.msra.mxu0 0.0
    %663 = vmatpush.msra.mxu0 0.0
    %664 = vmatpush.msra.mxu0 0.0
    %665 = vmatpush.msra.mxu0 0.0
    %666 = vmatpush.msra.mxu0 0.0
    %667 = vmatpush.msra.mxu0 0.0
    %668 = vmatpush.msra.mxu0 0.0
    %669 = vmatpush.msra.mxu0 0.0
    %670 = vmatpush.msra.mxu0 0.0
    %671 = vmatpush.msra.mxu0 0.0
    %672 = vmatpush.msra.mxu0 %v121
    %673 = vmatpush.msra.mxu0 %v114
    %674 = vmatpush.msra.mxu0 %v107
    %675 = vmatmul.f32.gmra.mxu0 %v251
    %v676 = vpop.f32.mrf.mxu0
    %v677 = vadd.f32 %v162, %v676
    %678 = vmatmul.f32.gmra.mxu0 %v254
    %v679 = vpop.f32.mrf.mxu0
    %v680 = vadd.f32 %v167, %v679
    %681 = vmatmul.f32.gmra.mxu0 %v257
    %v682 = vpop.f32.mrf.mxu0
    %v683 = vadd.f32 %v172, %v682
    %684 = vmatmul.f32.gmra.mxu0 %v260
    %v685 = vpop.f32.mrf.mxu0
    %v686 = vadd.f32 %v177, %v685
    %687 = vmatmul.f32.gmra.mxu0 %v263
    %v688 = vpop.f32.mrf.mxu0
    %v689 = vadd.f32 %v182, %v688
    %690 = vmatmul.f32.gmra.mxu0 %v266
    %v691 = vpop.f32.mrf.mxu0
    %v692 = vadd.f32 %v187, %v691
    %693 = vmatmul.f32.gmra.mxu0 %v269
    %v694 = vpop.f32.mrf.mxu0
    %v695 = vadd.f32 %v192, %v694
    %696 = vmatmul.f32.gmra.mxu0 %v272
    %v697 = vpop.f32.mrf.mxu0
    %v698 = vadd.f32 %v197, %v697
    %699 = vmatmul.f32.gmra.mxu0 %v275
    %v700 = vpop.f32.mrf.mxu0
    %v701 = vadd.f32 %v202, %v700
    %702 = vmatmul.f32.gmra.mxu0 %v278
    %v703 = vpop.f32.mrf.mxu0
    %v704 = vadd.f32 %v207, %v703
    %705 = vmatmul.f32.gmra.mxu0 %v281
    %v706 = vpop.f32.mrf.mxu0
    %v707 = vadd.f32 %v212, %v706
    %708 = vmatmul.f32.gmra.mxu0 %v284
    %v709 = vpop.f32.mrf.mxu0
    %v710 = vadd.f32 %v217, %v709
    %711 = vmatmul.f32.gmra.mxu0 %v287
    %v712 = vpop.f32.mrf.mxu0
    %v713 = vadd.f32 %v222, %v712
    %714 = vmatmul.f32.gmra.mxu0 %v290
    %v715 = vpop.f32.mrf.mxu0
    %v716 = vadd.f32 %v227, %v715
    %717 = vmatmul.f32.gmra.mxu0 %v293
    %v718 = vpop.f32.mrf.mxu0
    %v719 = vadd.f32 %v232, %v718
    %720 = vmatmul.f32.gmra.mxu0 %v296
    %v721 = vpop.f32.mrf.mxu0
    %v722 = vadd.f32 %v237, %v721
    %723 = vmatmul.f32.gmra.mxu0 %v299
    %v724 = vpop.f32.mrf.mxu0
    %v725 = vadd.f32 %v242, %v724
    %726 = vmatmul.f32.gmra.mxu0 %v302
    %v727 = vpop.f32.mrf.mxu0
    %v728 = vadd.f32 %v247, %v727
    %729 = vdwg.mxu0
    %730 = vmatpush.msra.mxu0 0.0
    %731 = vmatpush.msra.mxu0 0.0
    %732 = vmatpush.msra.mxu0 0.0
    %733 = vmatpush.msra.mxu0 0.0
    %734 = vmatpush.msra.mxu0 0.0
    %735 = vmatpush.msra.mxu0 0.0
    %736 = vmatpush.msra.mxu0 0.0
    %737 = vmatpush.msra.mxu0 0.0
    %738 = vmatpush.msra.mxu0 0.0
    %739 = vmatpush.msra.mxu0 0.0
    %740 = vmatpush.msra.mxu0 0.0
    %741 = vmatpush.msra.mxu0 0.0
    %742 = vmatpush.msra.mxu0 0.0
    %743 = vmatpush.msra.mxu0 %v122
    %744 = vmatpush.msra.mxu0 %v115
    %745 = vmatpush.msra.mxu0 %v108
    %746 = vmatmul.f32.gmra.mxu0 %v251
    %v747 = vpop.f32.mrf.mxu0
    %v748 = vadd.f32 %v162, %v747
    %749 = vmatmul.f32.gmra.mxu0 %v254
    %v750 = vpop.f32.mrf.mxu0
    %v751 = vadd.f32 %v167, %v750
    %752 = vmatmul.f32.gmra.mxu0 %v257
    %v753 = vpop.f32.mrf.mxu0
    %v754 = vadd.f32 %v172, %v753
    %755 = vmatmul.f32.gmra.mxu0 %v260
    %v756 = vpop.f32.mrf.mxu0
    %v757 = vadd.f32 %v177, %v756
    %758 = vmatmul.f32.gmra.mxu0 %v263
    %v759 = vpop.f32.mrf.mxu0
    %v760 = vadd.f32 %v182, %v759
    %761 = vmatmul.f32.gmra.mxu0 %v266
    %v762 = vpop.f32.mrf.mxu0
    %v763 = vadd.f32 %v187, %v762
    %764 = vmatmul.f32.gmra.mxu0 %v269
    %v765 = vpop.f32.mrf.mxu0
    %v766 = vadd.f32 %v192, %v765
    %767 = vmatmul.f32.gmra.mxu0 %v272
    %v768 = vpop.f32.mrf.mxu0
    %v769 = vadd.f32 %v197, %v768
    %770 = vmatmul.f32.gmra.mxu0 %v275
    %v771 = vpop.f32.mrf.mxu0
    %v772 = vadd.f32 %v202, %v771
    %773 = vmatmul.f32.gmra.mxu0 %v278
    %v774 = vpop.f32.mrf.mxu0
    %v775 = vadd.f32 %v207, %v774
    %776 = vmatmul.f32.gmra.mxu0 %v281
    %v777 = vpop.f32.mrf.mxu0
    %v778 = vadd.f32 %v212, %v777
    %779 = vmatmul.f32.gmra.mxu0 %v284
    %v780 = vpop.f32.mrf.mxu0
    %v781 = vadd.f32 %v217, %v780
    %782 = vmatmul.f32.gmra.mxu0 %v287
    %v783 = vpop.f32.mrf.mxu0
    %v784 = vadd.f32 %v222, %v783
    %785 = vmatmul.f32.gmra.mxu0 %v290
    %v786 = vpop.f32.mrf.mxu0
    %v787 = vadd.f32 %v227, %v786
    %788 = vmatmul.f32.gmra.mxu0 %v293
    %v789 = vpop.f32.mrf.mxu0
    %v790 = vadd.f32 %v232, %v789
    %791 = vmatmul.f32.gmra.mxu0 %v296
    %v792 = vpop.f32.mrf.mxu0
    %v793 = vadd.f32 %v237, %v792
    %794 = vmatmul.f32.gmra.mxu0 %v299
    %v795 = vpop.f32.mrf.mxu0
    %v796 = vadd.f32 %v242, %v795
    %797 = vmatmul.f32.gmra.mxu0 %v302
    %v798 = vpop.f32.mrf.mxu0
    %v799 = vadd.f32 %v247, %v798
    %800 = vdwg.mxu0
    %801 = vst [vmem:[#allocation2] sm:$0xff] %v322
    %802 = vst [vmem:[#allocation2 + $0x8] sm:$0xff] %v393
    %803 = vst [vmem:[#allocation2 + $0x10] sm:$0xff] %v464
    %804 = vst [vmem:[#allocation2 + $0x18] sm:$0xff] %v535
    %805 = vst [vmem:[#allocation2 + $0x20] sm:$0xff] %v606
    %806 = vst [vmem:[#allocation2 + $0x28] sm:$0xff] %v677
    %vm807 = vcmask 130048
    %808 = vst.msk [vmem:[#allocation2 + $0x30] sm:$0xff] %vm807, %v748
    %809 = vst [vmem:[#allocation2 + $0x38] sm:$0xff] %v325
    %810 = vst [vmem:[#allocation2 + $0x40] sm:$0xff] %v396
    %811 = vst [vmem:[#allocation2 + $0x48] sm:$0xff] %v467
    %812 = vst [vmem:[#allocation2 + $0x50] sm:$0xff] %v538
    %813 = vst [vmem:[#allocation2 + $0x58] sm:$0xff] %v609
    %814 = vst [vmem:[#allocation2 + $0x60] sm:$0xff] %v680
    %815 = vst.msk [vmem:[#allocation2 + $0x68] sm:$0xff] %vm807, %v751
    %816 = vst [vmem:[#allocation2 + $0x70] sm:$0xff] %v328
    %817 = vst [vmem:[#allocation2 + $0x78] sm:$0xff] %v399
    %818 = vst [vmem:[#allocation2 + $0x80] sm:$0xff] %v470
    %819 = vst [vmem:[#allocation2 + $0x88] sm:$0xff] %v541
    %820 = vst [vmem:[#allocation2 + $0x90] sm:$0xff] %v612
    %821 = vst [vmem:[#allocation2 + $0x98] sm:$0xff] %v683
    %822 = vst.msk [vmem:[#allocation2 + $0xa0] sm:$0xff] %vm807, %v754
    %823 = vst [vmem:[#allocation2 + $0xa8] sm:$0xff] %v331
    %824 = vst [vmem:[#allocation2 + $0xb0] sm:$0xff] %v402
    %825 = vst [vmem:[#allocation2 + $0xb8] sm:$0xff] %v473
    %826 = vst [vmem:[#allocation2 + $0xc0] sm:$0xff] %v544
    %827 = vst [vmem:[#allocation2 + $0xc8] sm:$0xff] %v615
    %828 = vst [vmem:[#allocation2 + $0xd0] sm:$0xff] %v686
    %829 = vst.msk [vmem:[#allocation2 + $0xd8] sm:$0xff] %vm807, %v757
    %830 = vst [vmem:[#allocation2 + $0xe0] sm:$0xff] %v334
    %831 = vst [vmem:[#allocation2 + $0xe8] sm:$0xff] %v405
    %832 = vst [vmem:[#allocation2 + $0xf0] sm:$0xff] %v476
    %833 = vst [vmem:[#allocation2 + $0xf8] sm:$0xff] %v547
    %834 = vst [vmem:[#allocation2 + $0x100] sm:$0xff] %v618
    %835 = vst [vmem:[#allocation2 + $0x108] sm:$0xff] %v689
    %836 = vst.msk [vmem:[#allocation2 + $0x110] sm:$0xff] %vm807, %v760
    %837 = vst [vmem:[#allocation2 + $0x118] sm:$0xff] %v337
    %838 = vst [vmem:[#allocation2 + $0x120] sm:$0xff] %v408
    %839 = vst [vmem:[#allocation2 + $0x128] sm:$0xff] %v479
    %840 = vst [vmem:[#allocation2 + $0x130] sm:$0xff] %v550
    %841 = vst [vmem:[#allocation2 + $0x138] sm:$0xff] %v621
    %842 = vst [vmem:[#allocation2 + $0x140] sm:$0xff] %v692
    %843 = vst.msk [vmem:[#allocation2 + $0x148] sm:$0xff] %vm807, %v763
    %844 = vst [vmem:[#allocation2 + $0x150] sm:$0xff] %v340
    %845 = vst [vmem:[#allocation2 + $0x158] sm:$0xff] %v411
    %846 = vst [vmem:[#allocation2 + $0x160] sm:$0xff] %v482
    %847 = vst [vmem:[#allocation2 + $0x168] sm:$0xff] %v553
    %848 = vst [vmem:[#allocation2 + $0x170] sm:$0xff] %v624
    %849 = vst [vmem:[#allocation2 + $0x178] sm:$0xff] %v695
    %850 = vst.msk [vmem:[#allocation2 + $0x180] sm:$0xff] %vm807, %v766
    %851 = vst [vmem:[#allocation2 + $0x188] sm:$0xff] %v343
    %852 = vst [vmem:[#allocation2 + $0x190] sm:$0xff] %v414
    %853 = vst [vmem:[#allocation2 + $0x198] sm:$0xff] %v485
    %854 = vst [vmem:[#allocation2 + $0x1a0] sm:$0xff] %v556
    %855 = vst [vmem:[#allocation2 + $0x1a8] sm:$0xff] %v627
    %856 = vst [vmem:[#allocation2 + $0x1b0] sm:$0xff] %v698
    %857 = vst.msk [vmem:[#allocation2 + $0x1b8] sm:$0xff] %vm807, %v769
    %858 = vst [vmem:[#allocation2 + $0x1c0] sm:$0xff] %v346
    %859 = vst [vmem:[#allocation2 + $0x1c8] sm:$0xff] %v417
    %860 = vst [vmem:[#allocation2 + $0x1d0] sm:$0xff] %v488
    %861 = vst [vmem:[#allocation2 + $0x1d8] sm:$0xff] %v559
    %862 = vst [vmem:[#allocation2 + $0x1e0] sm:$0xff] %v630
    %863 = vst [vmem:[#allocation2 + $0x1e8] sm:$0xff] %v701
    %864 = vst.msk [vmem:[#allocation2 + $0x1f0] sm:$0xff] %vm807, %v772
    %865 = vst [vmem:[#allocation2 + $0x1f8] sm:$0xff] %v349
    %866 = vst [vmem:[#allocation2 + $0x200] sm:$0xff] %v420
    %867 = vst [vmem:[#allocation2 + $0x208] sm:$0xff] %v491
    %868 = vst [vmem:[#allocation2 + $0x210] sm:$0xff] %v562
    %869 = vst [vmem:[#allocation2 + $0x218] sm:$0xff] %v633
    %870 = vst [vmem:[#allocation2 + $0x220] sm:$0xff] %v704
    %871 = vst.msk [vmem:[#allocation2 + $0x228] sm:$0xff] %vm807, %v775
    %872 = vst [vmem:[#allocation2 + $0x230] sm:$0xff] %v352
    %873 = vst [vmem:[#allocation2 + $0x238] sm:$0xff] %v423
    %874 = vst [vmem:[#allocation2 + $0x240] sm:$0xff] %v494
    %875 = vst [vmem:[#allocation2 + $0x248] sm:$0xff] %v565
    %876 = vst [vmem:[#allocation2 + $0x250] sm:$0xff] %v636
    %877 = vst [vmem:[#allocation2 + $0x258] sm:$0xff] %v707
    %878 = vst.msk [vmem:[#allocation2 + $0x260] sm:$0xff] %vm807, %v778
    %879 = vst [vmem:[#allocation2 + $0x268] sm:$0xff] %v355
    %880 = vst [vmem:[#allocation2 + $0x270] sm:$0xff] %v426
    %881 = vst [vmem:[#allocation2 + $0x278] sm:$0xff] %v497
    %882 = vst [vmem:[#allocation2 + $0x280] sm:$0xff] %v568
    %883 = vst [vmem:[#allocation2 + $0x288] sm:$0xff] %v639
    %884 = vst [vmem:[#allocation2 + $0x290] sm:$0xff] %v710
    %885 = vst.msk [vmem:[#allocation2 + $0x298] sm:$0xff] %vm807, %v781
    %886 = vst [vmem:[#allocation2 + $0x2a0] sm:$0xff] %v358
    %887 = vst [vmem:[#allocation2 + $0x2a8] sm:$0xff] %v429
    %888 = vst [vmem:[#allocation2 + $0x2b0] sm:$0xff] %v500
    %889 = vst [vmem:[#allocation2 + $0x2b8] sm:$0xff] %v571
    %890 = vst [vmem:[#allocation2 + $0x2c0] sm:$0xff] %v642
    %891 = vst [vmem:[#allocation2 + $0x2c8] sm:$0xff] %v713
    %892 = vst.msk [vmem:[#allocation2 + $0x2d0] sm:$0xff] %vm807, %v784
    %893 = vst [vmem:[#allocation2 + $0x2d8] sm:$0xff] %v361
    %894 = vst [vmem:[#allocation2 + $0x2e0] sm:$0xff] %v432
    %895 = vst [vmem:[#allocation2 + $0x2e8] sm:$0xff] %v503
    %896 = vst [vmem:[#allocation2 + $0x2f0] sm:$0xff] %v574
    %897 = vst [vmem:[#allocation2 + $0x2f8] sm:$0xff] %v645
    %898 = vst [vmem:[#allocation2 + $0x300] sm:$0xff] %v716
    %899 = vst.msk [vmem:[#allocation2 + $0x308] sm:$0xff] %vm807, %v787
    %900 = vst [vmem:[#allocation2 + $0x310] sm:$0xff] %v364
    %901 = vst [vmem:[#allocation2 + $0x318] sm:$0xff] %v435
    %902 = vst [vmem:[#allocation2 + $0x320] sm:$0xff] %v506
    %903 = vst [vmem:[#allocation2 + $0x328] sm:$0xff] %v577
    %904 = vst [vmem:[#allocation2 + $0x330] sm:$0xff] %v648
    %905 = vst [vmem:[#allocation2 + $0x338] sm:$0xff] %v719
    %906 = vst.msk [vmem:[#allocation2 + $0x340] sm:$0xff] %vm807, %v790
    %907 = vst [vmem:[#allocation2 + $0x348] sm:$0xff] %v367
    %908 = vst [vmem:[#allocation2 + $0x350] sm:$0xff] %v438
    %909 = vst [vmem:[#allocation2 + $0x358] sm:$0xff] %v509
    %910 = vst [vmem:[#allocation2 + $0x360] sm:$0xff] %v580
    %911 = vst [vmem:[#allocation2 + $0x368] sm:$0xff] %v651
    %912 = vst [vmem:[#allocation2 + $0x370] sm:$0xff] %v722
    %913 = vst.msk [vmem:[#allocation2 + $0x378] sm:$0xff] %vm807, %v793
    %914 = vst [vmem:[#allocation2 + $0x380] sm:$0xff] %v370
    %915 = vst [vmem:[#allocation2 + $0x388] sm:$0xff] %v441
    %916 = vst [vmem:[#allocation2 + $0x390] sm:$0xff] %v512
    %917 = vst [vmem:[#allocation2 + $0x398] sm:$0xff] %v583
    %918 = vst [vmem:[#allocation2 + $0x3a0] sm:$0xff] %v654
    %919 = vst [vmem:[#allocation2 + $0x3a8] sm:$0xff] %v725
    %920 = vst.msk [vmem:[#allocation2 + $0x3b0] sm:$0xff] %vm807, %v796
    %921 = vst [vmem:[#allocation2 + $0x3b8] sm:$0xff] %v373
    %922 = vst [vmem:[#allocation2 + $0x3c0] sm:$0xff] %v444
    %923 = vst [vmem:[#allocation2 + $0x3c8] sm:$0xff] %v515
    %924 = vst [vmem:[#allocation2 + $0x3d0] sm:$0xff] %v586
    %925 = vst [vmem:[#allocation2 + $0x3d8] sm:$0xff] %v657
    %926 = vst [vmem:[#allocation2 + $0x3e0] sm:$0xff] %v728
    %927 = vst.msk [vmem:[#allocation2 + $0x3e8] sm:$0xff] %vm807, %v799
    // Predicated region
    $region22: #{tpu_custom_call.1} parent=1 // pred_check
      _
    $region23: #{tpu_custom_call.1} parent=1 // pred_check_branch
      %929 = sbr.rel (0) target = $region25
    $region24: #{tpu_custom_call.1} parent=1 // pred_region
      %931 = vsyncadd [#allocation3], 0
      %s932 = sshll.u32 [#allocation2], 4
      %s933 = int_to_ptr.vmem [resolvable:$true] %s932
      %s934 = sshll.u32 %s5, 4
      %s935 = int_to_ptr.hbm [resolvable:$true] %s934
      %940 = dma.vmem_to_hbm [thread:$0]  %s933, 16128, %s935, [#allocation3], 896, 896, 56
    $region25: #{tpu_custom_call.1} parent=1 // pred_fallthru
      _
    // Predicated region
    $region26: #{tpu_custom_call.1} parent=1 // pred_check
      _
    $region27: #{tpu_custom_call.1} parent=1 // pred_check_branch
      %942 = sbr.rel (0) target = $region29
    $region28: #{tpu_custom_call.1} parent=1 // pred_region
      %944 = dma.done [#allocation3], 16128
    $region29: #{tpu_custom_call.1} parent=1 // pred_fallthru
      _
    %945 = vsyncpa [#allocation3], 1

</llo_original>
